<compile_context>
chip_gen: v5e
topology: v5e:2x2
jax: 0.10.0
libtpu: 0.0.40
codegen_flags: <defaults>
</compile_context>

<pallas_src>
import numpy as np

import jax
import jax.numpy as jnp
from jax.experimental import pallas as pl
from jax.experimental.pallas import tpu as pltpu


MASKED_SCORE = -1000000.0   # value the PyTorch module uses for masked pairs
PAD_SCORE = -1.0e9          # strictly below MASKED_SCORE: padded keys get zero weight
                            # even for fully-masked rows (keeps parity with torch).


def _round_up(x, m):
    return ((x + m - 1) // m) * m


def _tpu_generation():
    try:
        kind = jax.devices()[0].device_kind.lower()
    except Exception:
        return "unknown"
    if "v7" in kind:
        return "v7"
    if "v6" in kind:
        return "v6"
    if "v5" in kind:
        return "v5e" if ("lite" in kind or "5e" in kind) else "v5p"
    return "other"


def _physical_vmem_bytes(gen):
    try:
        return int(pltpu.get_tpu_info().vmem_capacity_bytes)
    except Exception:
        return (64 if gen == "v7" else 128) * 1024 * 1024


def auto_slab_dtype(gen=None):
    """bf16 tanh slab on v6e/v7x (bf16 VPU/EUP paths); f32 on v5e / unknown chips."""
    gen = _tpu_generation() if gen is None else gen
    return jnp.bfloat16 if gen in ("v6", "v7") else jnp.float32


def _attn_kernel(bw_ref,                                   # SMEM (1,) score bias
                 qp_ref, kpt_ref, vp_ref, bias_ref, ww_ref,  # VMEM blocks
                 o_ref,                                    # output block
                 m_ref, l_ref, acc_ref):                   # VMEM scratch (f32)
    ki = pl.program_id(1)
    nk = pl.num_programs(1)

    # ---- per-query-block init (once, before the first key tile).
    @pl.when(ki == 0)
    def _init():
        m_ref[...] = jnp.full(m_ref.shape, -jnp.inf, jnp.float32)
        l_ref[...] = jnp.zeros(l_ref.shape, jnp.float32)
        acc_ref[...] = jnp.zeros(acc_ref.shape, jnp.float32)

    # ---- additive-attention scores: true D on sublanes, TK on lanes.
    qp = qp_ref[...]            # (TQ, Ds)   compute dtype (f32 or bf16)
    kpt = kpt_ref[...]          # (Ds, TK)   key projection, pre-transposed
    ww = ww_ref[...]            # (Ds, TK)   score weight, pre-broadcast along lanes
    e = jnp.tanh(qp[:, :, None] + kpt[None, :, :])         # (TQ, Ds, TK) bounded slab
    prod = (e * ww[None, :, :]).astype(jnp.float32)        # accumulate reduction in f32
    raw = jnp.sum(prod, axis=1) + bw_ref[0]                # (TQ, TK), TK lane-dense

    bias = bias_ref[...]
    s = jnp.where(bias == 0.0, raw, bias)                  # masked -> -1e6, padded -> -1e9

    # ---- online softmax over the key axis (f32 statistics).
    m_prev = m_ref[...]
    m_new = jnp.maximum(m_prev, jnp.max(s, axis=1, keepdims=True))
    alpha = jnp.exp(m_prev - m_new)
    p = jnp.exp(s - m_new)
    l_ref[...] = alpha * l_ref[...] + jnp.sum(p, axis=1, keepdims=True)
    acc_ref[...] = alpha * acc_ref[...] + jnp.dot(
        p.astype(vp_ref.dtype), vp_ref[...], preferred_element_type=jnp.float32)
    m_ref[...] = m_new

    # ---- finalize after the last key tile.
    @pl.when(ki == nk - 1)
    def _finalize():
        inv_l = pl.reciprocal(l_ref[...], approx=True)     # EUP slot
        inv_l = inv_l * (2.0 - l_ref[...] * inv_l)         # one Newton step (f32 accuracy)
        o_ref[...] = (acc_ref[...] * inv_l).astype(o_ref.dtype)


def attn_forward(q, k, v, mask, params, *, tq=None, tk=None, slab_dtype=None,
                 interpret=False):
    """Additive-attention forward via a Pallas TPU kernel.

    q: (Nq, D), k/v: (Nk, D), mask: (Nq, Nk) bool -> (Nq, D) float32.
    Tiling, slab dtype and the VMEM limit are chosen per TPU generation unless
    overridden via tq/tk/slab_dtype.
    """
    f32 = jnp.float32
    Nq, D = q.shape
    Nk = k.shape[0]

    gen = _tpu_generation()
    cdt = auto_slab_dtype(gen) if slab_dtype is None else slab_dtype
    csize = np.dtype(cdt).itemsize
    phys_vmem = _physical_vmem_bytes(gen)

    # ---- pre-project Q/K/V once with plain XLA matmuls (kernel used to re-project K/V
    #      for every query block; HBM traffic is identical since kp/vp have k/v's size).
    qp = q.astype(f32) @ params["wq"].T.astype(f32) + params["bq"].astype(f32)
    kp = k.astype(f32) @ params["wk"].T.astype(f32) + params["bk"].astype(f32)
    vp = v.astype(f32) @ params["wv"].T.astype(f32) + params["bv"].astype(f32)

    # ---- tiling (generation aware).
    Ds = _round_up(D, 8)          # true feature dim, on the sublane axis
    Dp = _round_up(D, 128)        # lane-dense value/output feature dim
    if tq is None:
        tq = 128
    if tk is None:
        tk = {"v5e": 256, "v5p": 256, "v6": 512, "v7": 256}.get(gen, 128)

    TQ = _round_up(min(tq, _round_up(Nq, 8)), 8)
    TK = _round_up(min(tk, _round_up(Nk, 128)), 128)

    def footprint(TQ_, TK_):
        blocks = 2 * (TQ_ * Ds * csize        # qp (double-buffered)
                      + Ds * TK_ * csize      # kp^T
                      + TK_ * Dp * csize      # vp
                      + TQ_ * TK_ * 4         # bias plane (f32)
                      + Ds * TK_ * csize)     # ww
        out_scratch = 2 * TQ_ * Dp * 4 + TQ_ * (Dp + 2) * 4
        slab = TQ_ * Ds * TK_ * csize
        return blocks + out_scratch + 4 * slab   # ~4x slab for e / e*ww / f32 temporaries

    # Keep the working set well under physical VMEM (matters most on v7x: 64 MiB/TC).
    while footprint(TQ, TK) > 0.4 * phys_vmem and TK > 128:
        TK = max(128, (TK // 2) // 128 * 128)

    Nqp = _round_up(Nq, TQ)
    if gen == "v7":
        # Give both TensorCores work on the "parallel" query axis when Nq allows.
        while Nqp // TQ < 2 and TQ >= 16:
            TQ = max(8, (TQ // 2) // 8 * 8)
            Nqp = _round_up(Nq, TQ)
        # TODO(synk): for tiny Nq (< 16 rows) the key axis could instead be split across
        # the two TensorCores with a partial-softmax combine; not implemented here.
    Nkp = _round_up(Nk, TK)

    def pad2(x, rows, cols, dtype, cval=0.0):
        x = x.astype(f32)
        x = jnp.pad(x, ((0, rows - x.shape[0]), (0, cols - x.shape[1])),
                    constant_values=cval)
        return x.astype(dtype)

    qp_p = pad2(qp, Nqp, Ds, cdt)                       # (Nqp, Ds)
    kpt_p = pad2(kp, Nkp, Ds, cdt).T                    # (Ds, Nkp)  D on sublanes
    vp_p = pad2(vp, Nkp, Dp, cdt)                       # (Nkp, Dp)  lane-dense features
    ww_col = jnp.pad(params["ww"].astype(f32).reshape(D, 1), ((0, Ds - D), (0, 0)))
    ww_b = jnp.broadcast_to(ww_col, (Ds, TK)).astype(cdt)
    bw = params["bw"].reshape(1).astype(f32)            # scalar score bias -> SMEM

    # float32 additive mask plane: 0 = keep, -1e6 = masked (torch value), -1e9 = padding.
    # (bias must stay constructed from the bool mask so the exact ==0.0 test is valid.)
    bias = jnp.where(mask, 0.0, MASKED_SCORE).astype(f32)
    bias = jnp.pad(bias, ((0, Nqp - Nq), (0, Nkp - Nk)), constant_values=PAD_SCORE)

    grid = (Nqp // TQ, Nkp // TK)                       # key (reduction) axis innermost
    vmem_limit = int(min(0.8 * phys_vmem, max(2 * footprint(TQ, TK), 16 * 2**20)))

    out = pl.pallas_call(
        _attn_kernel,
        out_shape=jax.ShapeDtypeStruct((Nqp, Dp), f32),
        grid=grid,
        in_specs=[
            pl.BlockSpec(memory_space=pltpu.MemorySpace.SMEM),      # bw (scalar)
            pl.BlockSpec((TQ, Ds), lambda qi, ki: (qi, 0)),         # qp block
            pl.BlockSpec((Ds, TK), lambda qi, ki: (0, ki)),         # kp^T block
            pl.BlockSpec((TK, Dp), lambda qi, ki: (ki, 0)),         # vp block
            pl.BlockSpec((TQ, TK), lambda qi, ki: (qi, ki)),        # mask/pad bias block
            pl.BlockSpec((Ds, TK), lambda qi, ki: (0, 0)),          # ww (pre-broadcast)
        ],
        out_specs=pl.BlockSpec((TQ, Dp), lambda qi, ki: (qi, 0)),
        scratch_shapes=[
            pltpu.VMEM((TQ, 1), f32),      # m (running max)
            pltpu.VMEM((TQ, 1), f32),      # l (running denominator)
            pltpu.VMEM((TQ, Dp), f32),     # acc (running numerator)
        ],
        compiler_params=pltpu.CompilerParams(
            dimension_semantics=("parallel", "arbitrary"),
            vmem_limit_bytes=vmem_limit,
        ),
        interpret=interpret,
    )(bw, qp_p, kpt_p, vp_p, bias, ww_b)

    return out[:Nq, :D]


def attn_reference(q, k, v, mask, params):
    qp = q @ params["wq"].T + params["bq"]
    kp = k @ params["wk"].T + params["bk"]
    vp = v @ params["wv"].T + params["bv"]
    e = jnp.tanh(qp[:, None, :] + kp[None, :, :])
    scores = e @ params["ww"] + params["bw"]               # (Nq, Nk)
    scores = jnp.where(mask, scores, MASKED_SCORE)
    attn = jax.nn.softmax(scores, axis=1)
    return (attn[:, :, None] * vp[None, :, :]).sum(axis=1)


if __name__ == "__main__":
    MODEL_SIZE = 32     # config.MODEL_SIZE
    Nq, Nk, D = 8, 8, MODEL_SIZE

    key = jax.random.PRNGKey(0)
    ks = jax.random.split(key, 12)
    scale = 1.0 / jnp.sqrt(D)

    params = {
        "wq": jax.random.uniform(ks[0], (D, D), jnp.float32, -scale, scale),
        "bq": jax.random.uniform(ks[1], (D,), jnp.float32, -scale, scale),
        "wk": jax.random.uniform(ks[2], (D, D), jnp.float32, -scale, scale),
        "bk": jax.random.uniform(ks[3], (D,), jnp.float32, -scale, scale),
        "wv": jax.random.uniform(ks[4], (D, D), jnp.float32, -scale, scale),
        "bv": jax.random.uniform(ks[5], (D,), jnp.float32, -scale, scale),
        "ww": jax.random.uniform(ks[6], (D,), jnp.float32, -scale, scale),
        "bw": jax.random.uniform(ks[7], (1,), jnp.float32, -scale, scale),
    }

    q = jax.random.normal(ks[8], (Nq, D), jnp.float32)
    k = jax.random.normal(ks[9], (Nk, D), jnp.float32)
    v = jax.random.normal(ks[10], (Nk, D), jnp.float32)
    mask = jax.random.bernoulli(ks[11], p=0.7, shape=(Nq, Nk)) | jnp.eye(Nq, Nk, dtype=bool)

    out = attn_forward(q, k, v, mask, params)
    out = jax.block_until_ready(out)

    ref = attn_reference(q, k, v, mask, params)
    assert out.shape == (Nq, D)

    # Tolerance depends on whether the generation-aware bf16 tanh-slab path is active
    # (v6e/v7x); softmax stats are always f32, so bf16 only perturbs the scores slightly.
    bf16_slab = np.dtype(auto_slab_dtype()) == np.dtype(jnp.bfloat16)
    tol = 2e-2 if bf16_slab else 2e-4
    assert jnp.allclose(out, ref, atol=tol, rtol=tol), "mismatch vs reference"

    print("KERNEL_OK")
</pallas_src>

<mosaic_0001>
module attributes {stable_mosaic.version = 11 : i64} {
  func.func @_attn_kernel(%arg0: i32, %arg1: i32, %arg2: memref<1xf32, #tpu.memory_space<smem>>, %arg3: memref<8x32xf32, #tpu.memory_space<vmem>>, %arg4: memref<32x128xf32, #tpu.memory_space<vmem>>, %arg5: memref<128x128xf32, #tpu.memory_space<vmem>>, %arg6: memref<8x128xf32, #tpu.memory_space<vmem>>, %arg7: memref<32x128xf32, #tpu.memory_space<vmem>>, %arg8: memref<8x128xf32, #tpu.memory_space<vmem>>, %arg9: memref<8x1xf32, #tpu.memory_space<vmem>>, %arg10: memref<8x1xf32, #tpu.memory_space<vmem>>, %arg11: memref<8x128xf32, #tpu.memory_space<vmem>>) attributes {dimension_semantics = [#tpu.dimension_semantics<parallel>, #tpu.dimension_semantics<arbitrary>], iteration_bounds = array<i64: 1, 1>, scalar_prefetch = 0 : i64, scratch_operands = 3 : i64, tpu.core_type = #tpu.core_type<tc>, window_params = [{transform_indices = @transform_0, window_bounds = array<i64: 1>}, {transform_indices = @transform_1, window_bounds = array<i64: 8, 32>}, {transform_indices = @transform_2, window_bounds = array<i64: 32, 128>}, {transform_indices = @transform_3, window_bounds = array<i64: 128, 128>}, {transform_indices = @transform_4, window_bounds = array<i64: 8, 128>}, {pipeline_mode = #tpu.pipeline_mode<synchronous>, transform_indices = @transform_5, window_bounds = array<i64: 32, 128>}, {transform_indices = @transform_6, window_bounds = array<i64: 8, 128>}]} {
    %c0_i32 = arith.constant 0 : i32
    %0 = arith.cmpi eq, %arg1, %c0_i32 : i32
    %1 = arith.extui %0 : i1 to i32
    %c0_i32_0 = arith.constant 0 : i32
    %2 = arith.cmpi ne, %1, %c0_i32_0 : i32
    scf.if %2 {
      %cst_29 = arith.constant 0xFF800000 : f32
      %49 = vector.broadcast %cst_29 : f32 to vector<8x1xf32>
      %c0_30 = arith.constant 0 : index
      %c0_31 = arith.constant 0 : index
      %50 = vector.load %arg9[%c0_30, %c0_31] : memref<8x1xf32, #tpu.memory_space<vmem>>, vector<8x1xf32>
      tpu.vector_store %arg9[%c0_30, %c0_31], %49 {strides = array<i32>} : memref<8x1xf32, #tpu.memory_space<vmem>>, vector<8x1xf32>,
      %cst_32 = arith.constant 0.000000e+00 : f32
      %51 = vector.broadcast %cst_32 : f32 to vector<8x1xf32>
      %c0_33 = arith.constant 0 : index
      %c0_34 = arith.constant 0 : index
      %52 = vector.load %arg10[%c0_33, %c0_34] : memref<8x1xf32, #tpu.memory_space<vmem>>, vector<8x1xf32>
      tpu.vector_store %arg10[%c0_33, %c0_34], %51 {strides = array<i32>} : memref<8x1xf32, #tpu.memory_space<vmem>>, vector<8x1xf32>,
      %cst_35 = arith.constant 0.000000e+00 : f32
      %53 = vector.broadcast %cst_35 : f32 to vector<8x128xf32>
      %c0_36 = arith.constant 0 : index
      %c0_37 = arith.constant 0 : index
      %54 = vector.load %arg11[%c0_36, %c0_37] : memref<8x128xf32, #tpu.memory_space<vmem>>, vector<8x128xf32>
      tpu.vector_store %arg11[%c0_36, %c0_37], %53 {strides = array<i32>} : memref<8x128xf32, #tpu.memory_space<vmem>>, vector<8x128xf32>,
    } else {
    }
    %c0 = arith.constant 0 : index
    %c0_1 = arith.constant 0 : index
    %3 = vector.load %arg3[%c0, %c0_1] : memref<8x32xf32, #tpu.memory_space<vmem>>, vector<8x32xf32>
    %c0_2 = arith.constant 0 : index
    %c0_3 = arith.constant 0 : index
    %4 = vector.load %arg4[%c0_2, %c0_3] : memref<32x128xf32, #tpu.memory_space<vmem>>, vector<32x128xf32>
    %c0_4 = arith.constant 0 : index
    %c0_5 = arith.constant 0 : index
    %5 = vector.load %arg7[%c0_4, %c0_5] : memref<32x128xf32, #tpu.memory_space<vmem>>, vector<32x128xf32>
    %6 = vector.shape_cast %3 : vector<8x32xf32> to vector<8x32x1xf32>
    %7 = vector.shape_cast %4 : vector<32x128xf32> to vector<1x32x128xf32>
    %8 = vector.broadcast %6 : vector<8x32x1xf32> to vector<8x32x128xf32>
    %9 = vector.broadcast %7 : vector<1x32x128xf32> to vector<8x32x128xf32>
    %10 = arith.addf %8, %9 : vector<8x32x128xf32>
    %11 = math.tanh %10 : vector<8x32x128xf32>
    %12 = vector.shape_cast %5 : vector<32x128xf32> to vector<1x32x128xf32>
    %13 = vector.broadcast %12 : vector<1x32x128xf32> to vector<8x32x128xf32>
    %14 = arith.mulf %11, %13 : vector<8x32x128xf32>
    %cst = arith.constant dense<0.000000e+00> : vector<8x128xf32>
    %15 = vector.multi_reduction <add>, %14, %cst [1] : vector<8x32x128xf32> to vector<8x128xf32>
    %c0_6 = arith.constant 0 : index
    %16 = memref.load %arg2[%c0_6] : memref<1xf32, #tpu.memory_space<smem>>
    %17 = vector.broadcast %16 : f32 to vector<8x128xf32>
    %18 = arith.addf %15, %17 : vector<8x128xf32>
    %c0_7 = arith.constant 0 : index
    %c0_8 = arith.constant 0 : index
    %19 = vector.load %arg6[%c0_7, %c0_8] : memref<8x128xf32, #tpu.memory_space<vmem>>, vector<8x128xf32>
    %cst_9 = arith.constant 0.000000e+00 : f32
    %20 = vector.broadcast %cst_9 : f32 to vector<8x128xf32>
    %21 = arith.cmpf oeq, %19, %20 : vector<8x128xf32>
    %22 = arith.select %21, %18, %19 : vector<8x128xi1>, vector<8x128xf32>
    %c0_10 = arith.constant 0 : index
    %c0_11 = arith.constant 0 : index
    %23 = vector.load %arg9[%c0_10, %c0_11] : memref<8x1xf32, #tpu.memory_space<vmem>>, vector<8x1xf32>
    %cst_12 = arith.constant dense<0xFF800000> : vector<8xf32>
    %24 = vector.multi_reduction <maximumf>, %22, %cst_12 [1] : vector<8x128xf32> to vector<8xf32>
    %25 = vector.shape_cast %24 : vector<8xf32> to vector<8x1xf32>
    %26 = arith.maximumf %23, %25 : vector<8x1xf32>
    %27 = arith.subf %23, %26 : vector<8x1xf32>
    %28 = math.exp %27 : vector<8x1xf32>
    %29 = vector.broadcast %26 : vector<8x1xf32> to vector<8x128xf32>
    %30 = arith.subf %22, %29 : vector<8x128xf32>
    %31 = math.exp %30 : vector<8x128xf32>
    %c0_13 = arith.constant 0 : index
    %c0_14 = arith.constant 0 : index
    %32 = vector.load %arg10[%c0_13, %c0_14] : memref<8x1xf32, #tpu.memory_space<vmem>>, vector<8x1xf32>
    %33 = arith.mulf %28, %32 : vector<8x1xf32>
    %cst_15 = arith.constant dense<0.000000e+00> : vector<8xf32>
    %34 = vector.multi_reduction <add>, %31, %cst_15 [1] : vector<8x128xf32> to vector<8xf32>
    %35 = vector.shape_cast %34 : vector<8xf32> to vector<8x1xf32>
    %36 = arith.addf %33, %35 : vector<8x1xf32>
    %c0_16 = arith.constant 0 : index
    %c0_17 = arith.constant 0 : index
    %37 = vector.load %arg10[%c0_16, %c0_17] : memref<8x1xf32, #tpu.memory_space<vmem>>, vector<8x1xf32>
    tpu.vector_store %arg10[%c0_16, %c0_17], %36 {strides = array<i32>} : memref<8x1xf32, #tpu.memory_space<vmem>>, vector<8x1xf32>,
    %c0_18 = arith.constant 0 : index
    %c0_19 = arith.constant 0 : index
    %38 = vector.load %arg11[%c0_18, %c0_19] : memref<8x128xf32, #tpu.memory_space<vmem>>, vector<8x128xf32>
    %39 = vector.broadcast %28 : vector<8x1xf32> to vector<8x128xf32>
    %40 = arith.mulf %39, %38 : vector<8x128xf32>
    %c0_20 = arith.constant 0 : index
    %c0_21 = arith.constant 0 : index
    %41 = vector.load %arg5[%c0_20, %c0_21] : memref<128x128xf32, #tpu.memory_space<vmem>>, vector<128x128xf32>
    %cst_22 = arith.constant dense<0.000000e+00> : vector<8x128xf32>
    %42 = tpu.matmul %31, %41, %cst_22 {dimension_numbers = #tpu.dot_dimension_numbers<[1], [0], [0], [1], [0, 0, 1, 1], [], []>} : vector<8x128xf32>, vector<128x128xf32>, vector<8x128xf32> -> vector<8x128xf32>
    %43 = arith.addf %40, %42 : vector<8x128xf32>
    %c0_23 = arith.constant 0 : index
    %c0_24 = arith.constant 0 : index
    %44 = vector.load %arg11[%c0_23, %c0_24] : memref<8x128xf32, #tpu.memory_space<vmem>>, vector<8x128xf32>
    tpu.vector_store %arg11[%c0_23, %c0_24], %43 {strides = array<i32>} : memref<8x128xf32, #tpu.memory_space<vmem>>, vector<8x128xf32>,
    %c0_25 = arith.constant 0 : index
    %c0_26 = arith.constant 0 : index
    %45 = vector.load %arg9[%c0_25, %c0_26] : memref<8x1xf32, #tpu.memory_space<vmem>>, vector<8x1xf32>
    tpu.vector_store %arg9[%c0_25, %c0_26], %26 {strides = array<i32>} : memref<8x1xf32, #tpu.memory_space<vmem>>, vector<8x1xf32>,
    %c0_i32_27 = arith.constant 0 : i32
    %46 = arith.cmpi eq, %arg1, %c0_i32_27 : i32
    %47 = arith.extui %46 : i1 to i32
    %c0_i32_28 = arith.constant 0 : i32
    %48 = arith.cmpi ne, %47, %c0_i32_28 : i32
    scf.if %48 {
      %c0_29 = arith.constant 0 : index
      %c0_30 = arith.constant 0 : index
      %49 = vector.load %arg10[%c0_29, %c0_30] : memref<8x1xf32, #tpu.memory_space<vmem>>, vector<8x1xf32>
      %50 = tpu.reciprocal %49 {approx = true} : vector<8x1xf32> -> vector<8x1xf32>
      %c0_31 = arith.constant 0 : index
      %c0_32 = arith.constant 0 : index
      %51 = vector.load %arg10[%c0_31, %c0_32] : memref<8x1xf32, #tpu.memory_space<vmem>>, vector<8x1xf32>
      %52 = arith.mulf %51, %50 : vector<8x1xf32>
      %cst_33 = arith.constant 2.000000e+00 : f32
      %53 = vector.broadcast %cst_33 : f32 to vector<8x1xf32>
      %54 = arith.subf %53, %52 : vector<8x1xf32>
      %55 = arith.mulf %50, %54 : vector<8x1xf32>
      %c0_34 = arith.constant 0 : index
      %c0_35 = arith.constant 0 : index
      %56 = vector.load %arg11[%c0_34, %c0_35] : memref<8x128xf32, #tpu.memory_space<vmem>>, vector<8x128xf32>
      %57 = vector.broadcast %55 : vector<8x1xf32> to vector<8x128xf32>
      %58 = arith.mulf %56, %57 : vector<8x128xf32>
      %c0_36 = arith.constant 0 : index
      %c0_37 = arith.constant 0 : index
      %59 = vector.load %arg8[%c0_36, %c0_37] : memref<8x128xf32, #tpu.memory_space<vmem>>, vector<8x128xf32>
      tpu.vector_store %arg8[%c0_36, %c0_37], %58 {strides = array<i32>} : memref<8x128xf32, #tpu.memory_space<vmem>>, vector<8x128xf32>,
    } else {
    }
    return
  }
  func.func @transform_0(%arg0: i32, %arg1: i32) -> i32 {
    %c0_i32 = arith.constant 0 : i32
    %c0_i32_0 = arith.constant 0 : i32
    return %c0_i32 : i32
  }
  func.func @transform_1(%arg0: i32, %arg1: i32) -> (i32, i32) {
    %c0_i32 = arith.constant 0 : i32
    %c0_i32_0 = arith.constant 0 : i32
    return %arg0, %c0_i32 : i32, i32
  }
  func.func @transform_2(%arg0: i32, %arg1: i32) -> (i32, i32) {
    %c0_i32 = arith.constant 0 : i32
    %c0_i32_0 = arith.constant 0 : i32
    return %c0_i32, %arg1 : i32, i32
  }
  func.func @transform_3(%arg0: i32, %arg1: i32) -> (i32, i32) {
    %c0_i32 = arith.constant 0 : i32
    %c0_i32_0 = arith.constant 0 : i32
    return %arg1, %c0_i32 : i32, i32
  }
  func.func @transform_4(%arg0: i32, %arg1: i32) -> (i32, i32) {
    %c0_i32 = arith.constant 0 : i32
    return %arg0, %arg1 : i32, i32
  }
  func.func @transform_5(%arg0: i32, %arg1: i32) -> (i32, i32) {
    %c0_i32 = arith.constant 0 : i32
    %c0_i32_0 = arith.constant 0 : i32
    %c0_i32_1 = arith.constant 0 : i32
    return %c0_i32, %c0_i32_0 : i32, i32
  }
  func.func @transform_6(%arg0: i32, %arg1: i32) -> (i32, i32) {
    %c0_i32 = arith.constant 0 : i32
    %c0_i32_0 = arith.constant 0 : i32
    return %arg0, %c0_i32 : i32, i32
  }
}

</mosaic_0001>

<llo_original>
// kernel: tpu_custom_call.1
$region0: #{tpu_custom_call.1}
  #allocation0 [shape = 'u32[]', space=smem, size = 0x4, offset = 0x4, fixed_abs, tag = 'smem constant byte address 0x4 - core index']
  #allocation1 [shape = 'u32[72,128]{1,0:T(1,128)}', space=vmem, size = 0x9000, scoped, tag = 'internal scratch']
  #allocation2 [shape = 'f32[8,1]{1,0:T(8,128)}', space=vmem, size = 0x1000, scoped, tag = 'scratch operand']
  #allocation3 [shape = 'f32[8,1]{1,0:T(8,128)}', space=vmem, size = 0x1000, scoped, tag = 'scratch operand']
  #allocation4 [shape = 'f32[8,128]{1,0:T(8,128)}', space=vmem, size = 0x1000, scoped, tag = 'scratch operand']
  #allocation5 [shape = 'f32[1]{0:T(128)S(6)}', space=smem, size = 0x200, scoped, tag = 'scoped memory for tpu_custom_call.1']
  %s0 = inlined_call_operand.<no memory space> [shape: f32[1], index: 0, kind: input, shape index: {}]
  %s1 = inlined_call_operand.hbm [shape: f32[8,32], index: 1, kind: input, shape index: {}]
  %s2 = inlined_call_operand.hbm [shape: f32[32,128], index: 2, kind: input, shape index: {}]
  %s3 = inlined_call_operand.hbm [shape: f32[128,128], index: 3, kind: input, shape index: {}]
  %s4 = inlined_call_operand.hbm [shape: f32[8,128], index: 4, kind: input, shape index: {}]
  %s5 = inlined_call_operand.hbm [shape: f32[32,128], index: 5, kind: input, shape index: {}]
  %s6 = inlined_call_operand.hbm [shape: f32[8,128], index: 6, kind: output, shape index: {}]
  %s7 = sld [smem:[#allocation0]]
  $region62: #{tpu_custom_call.1} parent=0
    _
  %s9 = ssub.s32 1, %s7
  %s10 = scalar_select 0, %s9, %s7
  %11 = sst [smem:[#allocation5]] %s0
  $region1: #{tpu_custom_call.1} parent=0
    #allocation6 [shape = 'u8[4096]{0}', space=vmem, size = 0x1000, scoped, tag = 'input window, operand 1, single buffered']
    #allocation7 [shape = 's32[1]{0}', space=sflag, size = 0x4, scoped, tag = 'scoped memory for tpu_custom_call.1']
    #allocation8 [shape = 's32[1]{0}', space=sflag, size = 0x4, scoped, tag = 'scoped memory for tpu_custom_call.1']
    #allocation9 [shape = 'u8[16384]{0}', space=vmem, size = 0x4000, scoped, tag = 'input window, operand 2, single buffered']
    #allocation10 [shape = 's32[1]{0}', space=sflag, size = 0x4, scoped, tag = 'scoped memory for tpu_custom_call.1']
    #allocation11 [shape = 'u8[65536]{0}', space=vmem, size = 0x10000, scoped, tag = 'input window, operand 3, single buffered']
    #allocation12 [shape = 'u8[4096]{0}', space=vmem, size = 0x1000, scoped, tag = 'input window, operand 4, single buffered']
    #allocation13 [shape = 's32[1]{0}', space=sflag, size = 0x4, scoped, tag = 'scoped memory for tpu_custom_call.1']
    #allocation14 [shape = 'u8[16384]{0}', space=vmem, size = 0x4000, scoped, tag = 'input window, operand 5, single buffered']
    #allocation15 [shape = 'u8[4096]{0}', space=vmem, size = 0x1000, scoped, tag = 'output window, operand 0, single buffered']
    %12 = vsyncpa [#allocation7], 0
    %13 = vsyncpa [#allocation10], 0
    %14 = vsyncpa [#allocation13], 0
    %15 = vsyncpa [#allocation8], 0
    // Predicated region
    $region2: #{tpu_custom_call.1} parent=1 // pred_check
      _
    $region3: #{tpu_custom_call.1} parent=1 // pred_check_branch
      %17 = sbr.rel (0) target = $region5
    $region4: #{tpu_custom_call.1} parent=1 // pred_region
      _
    $region5: #{tpu_custom_call.1} parent=1 // pred_fallthru
      _
    // Predicated region
    $region6: #{tpu_custom_call.1} parent=1 // pred_check
      _
    $region7: #{tpu_custom_call.1} parent=1 // pred_check_branch
      %19 = sbr.rel (0) target = $region9
    $region8: #{tpu_custom_call.1} parent=1 // pred_region
      %21 = vsyncadd [#allocation7], 0
      %s23 = sshll.u32 %s1, 4
      %s24 = int_to_ptr.hbm [resolvable:$true] %s23
      %s25 = sshll.u32 [#allocation6], 4
      %s26 = int_to_ptr.vmem [resolvable:$true] %s25
      %28 = dma.hbm_to_vmem [thread:$0]  %s24, 128, %s26, [#allocation7]
    $region9: #{tpu_custom_call.1} parent=1 // pred_fallthru
      _
    // Predicated region
    $region10: #{tpu_custom_call.1} parent=1 // pred_check
      _
    $region11: #{tpu_custom_call.1} parent=1 // pred_check_branch
      %30 = sbr.rel (0) target = $region13
    $region12: #{tpu_custom_call.1} parent=1 // pred_region
      %32 = vsyncadd [#allocation10], 0
      %s33 = sshll.u32 %s2, 4
      %s34 = int_to_ptr.hbm [resolvable:$true] %s33
      %s35 = sshll.u32 [#allocation9], 4
      %s36 = int_to_ptr.vmem [resolvable:$true] %s35
      %41 = dma.hbm_to_vmem [thread:$0]  %s34, 512, %s36, [#allocation10], 128, 128, 8
    $region13: #{tpu_custom_call.1} parent=1 // pred_fallthru
      _
    // Predicated region
    $region14: #{tpu_custom_call.1} parent=1 // pred_check
      _
    $region15: #{tpu_custom_call.1} parent=1 // pred_check_branch
      %43 = sbr.rel (0) target = $region17
    $region16: #{tpu_custom_call.1} parent=1 // pred_region
      %45 = vsyncadd [#allocation10], 0
      %s46 = sshll.u32 %s3, 4
      %s47 = int_to_ptr.hbm [resolvable:$true] %s46
      %s48 = sshll.u32 [#allocation11], 4
      %s49 = int_to_ptr.vmem [resolvable:$true] %s48
      %54 = dma.hbm_to_vmem [thread:$0]  %s47, 2048, %s49, [#allocation10], 128, 128, 8
    $region17: #{tpu_custom_call.1} parent=1 // pred_fallthru
      _
    // Predicated region
    $region18: #{tpu_custom_call.1} parent=1 // pred_check
      _
    $region19: #{tpu_custom_call.1} parent=1 // pred_check_branch
      %56 = sbr.rel (0) target = $region21
    $region20: #{tpu_custom_call.1} parent=1 // pred_region
      %58 = vsyncadd [#allocation13], 0
      %s60 = sshll.u32 %s4, 4
      %s61 = int_to_ptr.hbm [resolvable:$true] %s60
      %s62 = sshll.u32 [#allocation12], 4
      %s63 = int_to_ptr.vmem [resolvable:$true] %s62
      %65 = dma.hbm_to_vmem [thread:$0]  %s61, 128, %s63, [#allocation13]
    $region21: #{tpu_custom_call.1} parent=1 // pred_fallthru
      _
    // Predicated region
    $region22: #{tpu_custom_call.1} parent=1 // pred_check
      _
    $region23: #{tpu_custom_call.1} parent=1 // pred_check_branch
      %67 = sbr.rel (0) target = $region25
    $region24: #{tpu_custom_call.1} parent=1 // pred_region
      %69 = vsyncadd [#allocation13], 0
      %s70 = sshll.u32 %s5, 4
      %s71 = int_to_ptr.hbm [resolvable:$true] %s70
      %s72 = sshll.u32 [#allocation14], 4
      %s73 = int_to_ptr.vmem [resolvable:$true] %s72
      %78 = dma.hbm_to_vmem [thread:$0]  %s71, 512, %s73, [#allocation13], 128, 128, 8
    $region25: #{tpu_custom_call.1} parent=1 // pred_fallthru
      _
    // Predicated region
    $region26: #{tpu_custom_call.1} parent=1 // pred_check
      _
    $region27: #{tpu_custom_call.1} parent=1 // pred_check_branch
      %80 = sbr.rel (0) target = $region29
    $region28: #{tpu_custom_call.1} parent=1 // pred_region
      %82 = dma.done [#allocation7], 128
    $region29: #{tpu_custom_call.1} parent=1 // pred_fallthru
      _
    // Predicated region
    $region30: #{tpu_custom_call.1} parent=1 // pred_check
      _
    $region31: #{tpu_custom_call.1} parent=1 // pred_check_branch
      %84 = sbr.rel (0) target = $region33
    $region32: #{tpu_custom_call.1} parent=1 // pred_region
      %86 = dma.done [#allocation10], 512
    $region33: #{tpu_custom_call.1} parent=1 // pred_fallthru
      _
    // Predicated region
    $region34: #{tpu_custom_call.1} parent=1 // pred_check
      _
    $region35: #{tpu_custom_call.1} parent=1 // pred_check_branch
      %88 = sbr.rel (0) target = $region37
    $region36: #{tpu_custom_call.1} parent=1 // pred_region
      %90 = dma.done [#allocation10], 2048
    $region37: #{tpu_custom_call.1} parent=1 // pred_fallthru
      _
    // Predicated region
    $region38: #{tpu_custom_call.1} parent=1 // pred_check
      _
    $region39: #{tpu_custom_call.1} parent=1 // pred_check_branch
      %92 = sbr.rel (0) target = $region41
    $region40: #{tpu_custom_call.1} parent=1 // pred_region
      %94 = dma.done [#allocation13], 128
    $region41: #{tpu_custom_call.1} parent=1 // pred_fallthru
      _
    // Predicated region
    $region42: #{tpu_custom_call.1} parent=1 // pred_check
      _
    $region43: #{tpu_custom_call.1} parent=1 // pred_check_branch
      %96 = sbr.rel (0) target = $region45
    $region44: #{tpu_custom_call.1} parent=1 // pred_region
      %98 = dma.done [#allocation13], 512
    $region45: #{tpu_custom_call.1} parent=1 // pred_fallthru
      _
    %p99 = scmp.eq.s32.totalorder 0, 0
    // Predicated region
    $region46: #{tpu_custom_call.1} parent=1 // pred_check
      %p100 = pneg %p99
    $region47: #{tpu_custom_call.1} parent=1 // pred_check_branch
      %102 = sbr.rel (%p100) target = $region49
    $region48: #{tpu_custom_call.1} parent=1 // pred_region
      %vm103 = vcmask 7168
      %104 = vst.msk [vmem:[#allocation2] sm:$0xff] %vm103, -inf
      %105 = vst.msk [vmem:[#allocation3] sm:$0xff] %vm103, 0.0
      %106 = vst [vmem:[#allocation4] sm:$0xff] 0.0
    $region49: #{tpu_custom_call.1} parent=1 // pred_fallthru
      _
    %v107 = vld [vmem:[#allocation6] sm:$0xff]
    %v108 = vld [vmem:[#allocation9] sm:$0xff]
    %v109 = vld [vmem:[#allocation9 + $0x8] sm:$0xff]
    %v110 = vld [vmem:[#allocation9 + $0x10] sm:$0xff]
    %v111 = vld [vmem:[#allocation9 + $0x18] sm:$0xff]
    %v112 = vld [vmem:[#allocation14] sm:$0xff]
    %v113 = vld [vmem:[#allocation14 + $0x8] sm:$0xff]
    %v114 = vld [vmem:[#allocation14 + $0x10] sm:$0xff]
    %v115 = vld [vmem:[#allocation14 + $0x18] sm:$0xff]
    %v116 = vperm.slane %v107, 0
    %v117 = vlaneseq
    %v118 = vshrl.u32 %v117, 7
    %120 = vset.pattern.permute.xlu0 %v118
    %121 = vperm.xlu0 %120, %v116
    %v122 = vpop.permute.xlu0 %121
    %v123 = vlaneseq
    %v124 = vshrl.u32 %v123, 7
    %v125 = vadd.s32 %v124, 8
    %126 = vset.pattern.permute.xlu0 %v125
    %127 = vperm.xlu0 %126, %v116
    %v128 = vpop.permute.xlu0 %127
    %v129 = vlaneseq
    %v130 = vshrl.u32 %v129, 7
    %v131 = vadd.s32 %v130, 16
    %132 = vset.pattern.permute.xlu0 %v131
    %133 = vperm.xlu0 %132, %v116
    %v134 = vpop.permute.xlu0 %133
    %v135 = vlaneseq
    %v136 = vshrl.u32 %v135, 7
    %v137 = vadd.s32 %v136, 24
    %138 = vset.pattern.permute.xlu0 %v137
    %139 = vperm.xlu0 %138, %v116
    %v140 = vpop.permute.xlu0 %139
    %v141 = vperm.slane %v107, 1
    %v142 = vlaneseq
    %v143 = vshrl.u32 %v142, 7
    %145 = vset.pattern.permute.xlu0 %v143
    %146 = vperm.xlu0 %145, %v141
    %v147 = vpop.permute.xlu0 %146
    %v148 = vlaneseq
    %v149 = vshrl.u32 %v148, 7
    %v150 = vadd.s32 %v149, 8
    %151 = vset.pattern.permute.xlu0 %v150
    %152 = vperm.xlu0 %151, %v141
    %v153 = vpop.permute.xlu0 %152
    %v154 = vlaneseq
    %v155 = vshrl.u32 %v154, 7
    %v156 = vadd.s32 %v155, 16
    %157 = vset.pattern.permute.xlu0 %v156
    %158 = vperm.xlu0 %157, %v141
    %v159 = vpop.permute.xlu0 %158
    %v160 = vlaneseq
    %v161 = vshrl.u32 %v160, 7
    %v162 = vadd.s32 %v161, 24
    %163 = vset.pattern.permute.xlu0 %v162
    %164 = vperm.xlu0 %163, %v141
    %v165 = vpop.permute.xlu0 %164
    %v166 = vperm.slane %v107, 2
    %v167 = vlaneseq
    %v168 = vshrl.u32 %v167, 7
    %170 = vset.pattern.permute.xlu0 %v168
    %171 = vperm.xlu0 %170, %v166
    %v172 = vpop.permute.xlu0 %171
    %v173 = vlaneseq
    %v174 = vshrl.u32 %v173, 7
    %v175 = vadd.s32 %v174, 8
    %176 = vset.pattern.permute.xlu0 %v175
    %177 = vperm.xlu0 %176, %v166
    %v178 = vpop.permute.xlu0 %177
    %v179 = vlaneseq
    %v180 = vshrl.u32 %v179, 7
    %v181 = vadd.s32 %v180, 16
    %182 = vset.pattern.permute.xlu0 %v181
    %183 = vperm.xlu0 %182, %v166
    %v184 = vpop.permute.xlu0 %183
    %v185 = vlaneseq
    %v186 = vshrl.u32 %v185, 7
    %v187 = vadd.s32 %v186, 24
    %188 = vset.pattern.permute.xlu0 %v187
    %189 = vperm.xlu0 %188, %v166
    %v190 = vpop.permute.xlu0 %189
    %v191 = vperm.slane %v107, 3
    %v192 = vlaneseq
    %v193 = vshrl.u32 %v192, 7
    %195 = vset.pattern.permute.xlu0 %v193
    %196 = vperm.xlu0 %195, %v191
    %v197 = vpop.permute.xlu0 %196
    %v198 = vlaneseq
    %v199 = vshrl.u32 %v198, 7
    %v200 = vadd.s32 %v199, 8
    %201 = vset.pattern.permute.xlu0 %v200
    %202 = vperm.xlu0 %201, %v191
    %v203 = vpop.permute.xlu0 %202
    %v204 = vlaneseq
    %v205 = vshrl.u32 %v204, 7
    %v206 = vadd.s32 %v205, 16
    %207 = vset.pattern.permute.xlu0 %v206
    %208 = vperm.xlu0 %207, %v191
    %v209 = vpop.permute.xlu0 %208
    %v210 = vlaneseq
    %v211 = vshrl.u32 %v210, 7
    %v212 = vadd.s32 %v211, 24
    %213 = vset.pattern.permute.xlu0 %v212
    %214 = vperm.xlu0 %213, %v191
    %v215 = vpop.permute.xlu0 %214
    %v216 = vperm.slane %v107, 4
    %v217 = vlaneseq
    %v218 = vshrl.u32 %v217, 7
    %220 = vset.pattern.permute.xlu0 %v218
    %221 = vperm.xlu0 %220, %v216
    %v222 = vpop.permute.xlu0 %221
    %v223 = vlaneseq
    %v224 = vshrl.u32 %v223, 7
    %v225 = vadd.s32 %v224, 8
    %226 = vset.pattern.permute.xlu0 %v225
    %227 = vperm.xlu0 %226, %v216
    %v228 = vpop.permute.xlu0 %227
    %v229 = vlaneseq
    %v230 = vshrl.u32 %v229, 7
    %v231 = vadd.s32 %v230, 16
    %232 = vset.pattern.permute.xlu0 %v231
    %233 = vperm.xlu0 %232, %v216
    %v234 = vpop.permute.xlu0 %233
    %v235 = vlaneseq
    %v236 = vshrl.u32 %v235, 7
    %v237 = vadd.s32 %v236, 24
    %238 = vset.pattern.permute.xlu0 %v237
    %239 = vperm.xlu0 %238, %v216
    %v240 = vpop.permute.xlu0 %239
    %v241 = vperm.slane %v107, 5
    %v242 = vlaneseq
    %v243 = vshrl.u32 %v242, 7
    %245 = vset.pattern.permute.xlu0 %v243
    %246 = vperm.xlu0 %245, %v241
    %v247 = vpop.permute.xlu0 %246
    %v248 = vlaneseq
    %v249 = vshrl.u32 %v248, 7
    %v250 = vadd.s32 %v249, 8
    %251 = vset.pattern.permute.xlu0 %v250
    %252 = vperm.xlu0 %251, %v241
    %v253 = vpop.permute.xlu0 %252
    %v254 = vlaneseq
    %v255 = vshrl.u32 %v254, 7
    %v256 = vadd.s32 %v255, 16
    %257 = vset.pattern.permute.xlu0 %v256
    %258 = vperm.xlu0 %257, %v241
    %v259 = vpop.permute.xlu0 %258
    %v260 = vlaneseq
    %v261 = vshrl.u32 %v260, 7
    %v262 = vadd.s32 %v261, 24
    %263 = vset.pattern.permute.xlu0 %v262
    %264 = vperm.xlu0 %263, %v241
    %v265 = vpop.permute.xlu0 %264
    %v266 = vperm.slane %v107, 6
    %v267 = vlaneseq
    %v268 = vshrl.u32 %v267, 7
    %270 = vset.pattern.permute.xlu0 %v268
    %271 = vperm.xlu0 %270, %v266
    %v272 = vpop.permute.xlu0 %271
    %v273 = vlaneseq
    %v274 = vshrl.u32 %v273, 7
    %v275 = vadd.s32 %v274, 8
    %276 = vset.pattern.permute.xlu0 %v275
    %277 = vperm.xlu0 %276, %v266
    %v278 = vpop.permute.xlu0 %277
    %v279 = vlaneseq
    %v280 = vshrl.u32 %v279, 7
    %v281 = vadd.s32 %v280, 16
    %282 = vset.pattern.permute.xlu0 %v281
    %283 = vperm.xlu0 %282, %v266
    %v284 = vpop.permute.xlu0 %283
    %v285 = vlaneseq
    %v286 = vshrl.u32 %v285, 7
    %v287 = vadd.s32 %v286, 24
    %288 = vset.pattern.permute.xlu0 %v287
    %289 = vperm.xlu0 %288, %v266
    %v290 = vpop.permute.xlu0 %289
    %v291 = vperm.slane %v107, 7
    %v292 = vlaneseq
    %v293 = vshrl.u32 %v292, 7
    %295 = vset.pattern.permute.xlu0 %v293
    %296 = vperm.xlu0 %295, %v291
    %v297 = vpop.permute.xlu0 %296
    %v298 = vlaneseq
    %v299 = vshrl.u32 %v298, 7
    %v300 = vadd.s32 %v299, 8
    %301 = vset.pattern.permute.xlu0 %v300
    %302 = vperm.xlu0 %301, %v291
    %v303 = vpop.permute.xlu0 %302
    %v304 = vlaneseq
    %v305 = vshrl.u32 %v304, 7
    %v306 = vadd.s32 %v305, 16
    %307 = vset.pattern.permute.xlu0 %v306
    %308 = vperm.xlu0 %307, %v291
    %v309 = vpop.permute.xlu0 %308
    %v310 = vlaneseq
    %v311 = vshrl.u32 %v310, 7
    %v312 = vadd.s32 %v311, 24
    %313 = vset.pattern.permute.xlu0 %v312
    %314 = vperm.xlu0 %313, %v291
    %v315 = vpop.permute.xlu0 %314
    %v316 = vadd.f32 %v122, %v108
    %v317 = vadd.f32 %v128, %v109
    %v318 = vadd.f32 %v134, %v110
    %v319 = vadd.f32 %v140, %v111
    %v320 = vadd.f32 %v147, %v108
    %v321 = vadd.f32 %v153, %v109
    %v322 = vadd.f32 %v159, %v110
    %v323 = vadd.f32 %v165, %v111
    %v324 = vadd.f32 %v172, %v108
    %v325 = vadd.f32 %v178, %v109
    %v326 = vadd.f32 %v184, %v110
    %v327 = vadd.f32 %v190, %v111
    %v328 = vadd.f32 %v197, %v108
    %v329 = vadd.f32 %v203, %v109
    %v330 = vadd.f32 %v209, %v110
    %v331 = vadd.f32 %v215, %v111
    %v332 = vadd.f32 %v222, %v108
    %v333 = vadd.f32 %v228, %v109
    %v334 = vadd.f32 %v234, %v110
    %v335 = vadd.f32 %v240, %v111
    %v336 = vadd.f32 %v247, %v108
    %v337 = vadd.f32 %v253, %v109
    %v338 = vadd.f32 %v259, %v110
    %v339 = vadd.f32 %v265, %v111
    %v340 = vadd.f32 %v272, %v108
    %v341 = vadd.f32 %v278, %v109
    %v342 = vadd.f32 %v284, %v110
    %v343 = vadd.f32 %v290, %v111
    %v344 = vadd.f32 %v297, %v108
    %v345 = vadd.f32 %v303, %v109
    %v346 = vadd.f32 %v309, %v110
    %v347 = vadd.f32 %v315, %v111
    %v348 = vtanh.pop %v316
    %v349 = vtanh.pop %v317
    %v350 = vtanh.pop %v318
    %v351 = vtanh.pop %v319
    %v352 = vtanh.pop %v320
    %v353 = vtanh.pop %v321
    %v354 = vtanh.pop %v322
    %v355 = vtanh.pop %v323
    %v356 = vtanh.pop %v324
    %v357 = vtanh.pop %v325
    %v358 = vtanh.pop %v326
    %v359 = vtanh.pop %v327
    %v360 = vtanh.pop %v328
    %v361 = vtanh.pop %v329
    %v362 = vtanh.pop %v330
    %v363 = vtanh.pop %v331
    %v364 = vtanh.pop %v332
    %v365 = vtanh.pop %v333
    %v366 = vtanh.pop %v334
    %v367 = vtanh.pop %v335
    %v368 = vtanh.pop %v336
    %v369 = vtanh.pop %v337
    %v370 = vtanh.pop %v338
    %v371 = vtanh.pop %v339
    %v372 = vtanh.pop %v340
    %v373 = vtanh.pop %v341
    %v374 = vtanh.pop %v342
    %v375 = vtanh.pop %v343
    %v376 = vtanh.pop %v344
    %v377 = vtanh.pop %v345
    %v378 = vtanh.pop %v346
    %v379 = vtanh.pop %v347
    %v380 = vmul.f32 %v348, %v112
    %v381 = vmul.f32 %v349, %v113
    %v382 = vmul.f32 %v350, %v114
    %v383 = vmul.f32 %v351, %v115
    %v384 = vmul.f32 %v352, %v112
    %v385 = vmul.f32 %v353, %v113
    %v386 = vmul.f32 %v354, %v114
    %v387 = vmul.f32 %v355, %v115
    %v388 = vmul.f32 %v356, %v112
    %v389 = vmul.f32 %v357, %v113
    %v390 = vmul.f32 %v358, %v114
    %v391 = vmul.f32 %v359, %v115
    %v392 = vmul.f32 %v360, %v112
    %v393 = vmul.f32 %v361, %v113
    %v394 = vmul.f32 %v362, %v114
    %v395 = vmul.f32 %v363, %v115
    %v396 = vmul.f32 %v364, %v112
    %v397 = vmul.f32 %v365, %v113
    %v398 = vmul.f32 %v366, %v114
    %v399 = vmul.f32 %v367, %v115
    %v400 = vmul.f32 %v368, %v112
    %v401 = vmul.f32 %v369, %v113
    %v402 = vmul.f32 %v370, %v114
    %v403 = vmul.f32 %v371, %v115
    %v404 = vmul.f32 %v372, %v112
    %v405 = vmul.f32 %v373, %v113
    %v406 = vmul.f32 %v374, %v114
    %v407 = vmul.f32 %v375, %v115
    %v408 = vmul.f32 %v376, %v112
    %v409 = vmul.f32 %v377, %v113
    %v410 = vmul.f32 %v378, %v114
    %v411 = vmul.f32 %v379, %v115
    %v412 = vadd.f32 %v380, %v381
    %v413 = vadd.f32 %v412, %v382
    %v414 = vadd.f32 %v413, %v383
    %v415 = vrot.slane %v414, 4
    %v416 = vadd.f32 %v414, %v415
    %v417 = vrot.slane %v416, 2
    %v418 = vadd.f32 %v416, %v417
    %v419 = vrot.slane %v418, 1
    %v420 = vadd.f32 %v418, %v419
    %v421 = vadd.f32 %v384, %v385
    %v422 = vadd.f32 %v421, %v386
    %v423 = vadd.f32 %v422, %v387
    %v424 = vrot.slane %v423, 4
    %v425 = vadd.f32 %v423, %v424
    %v426 = vrot.slane %v425, 2
    %v427 = vadd.f32 %v425, %v426
    %v428 = vrot.slane %v427, 1
    %v429 = vadd.f32 %v427, %v428
    %v430 = vadd.f32 %v388, %v389
    %v431 = vadd.f32 %v430, %v390
    %v432 = vadd.f32 %v431, %v391
    %v433 = vrot.slane %v432, 4
    %v434 = vadd.f32 %v432, %v433
    %v435 = vrot.slane %v434, 2
    %v436 = vadd.f32 %v434, %v435
    %v437 = vrot.slane %v436, 1
    %v438 = vadd.f32 %v436, %v437
    %v439 = vadd.f32 %v392, %v393
    %v440 = vadd.f32 %v439, %v394
    %v441 = vadd.f32 %v440, %v395
    %v442 = vrot.slane %v441, 4
    %v443 = vadd.f32 %v441, %v442
    %v444 = vrot.slane %v443, 2
    %v445 = vadd.f32 %v443, %v444
    %v446 = vrot.slane %v445, 1
    %v447 = vadd.f32 %v445, %v446
    %v448 = vadd.f32 %v396, %v397
    %v449 = vadd.f32 %v448, %v398
    %v450 = vadd.f32 %v449, %v399
    %v451 = vrot.slane %v450, 4
    %v452 = vadd.f32 %v450, %v451
    %v453 = vrot.slane %v452, 2
    %v454 = vadd.f32 %v452, %v453
    %v455 = vrot.slane %v454, 1
    %v456 = vadd.f32 %v454, %v455
    %v457 = vadd.f32 %v400, %v401
    %v458 = vadd.f32 %v457, %v402
    %v459 = vadd.f32 %v458, %v403
    %v460 = vrot.slane %v459, 4
    %v461 = vadd.f32 %v459, %v460
    %v462 = vrot.slane %v461, 2
    %v463 = vadd.f32 %v461, %v462
    %v464 = vrot.slane %v463, 1
    %v465 = vadd.f32 %v463, %v464
    %v466 = vadd.f32 %v404, %v405
    %v467 = vadd.f32 %v466, %v406
    %v468 = vadd.f32 %v467, %v407
    %v469 = vrot.slane %v468, 4
    %v470 = vadd.f32 %v468, %v469
    %v471 = vrot.slane %v470, 2
    %v472 = vadd.f32 %v470, %v471
    %v473 = vrot.slane %v472, 1
    %v474 = vadd.f32 %v472, %v473
    %v475 = vadd.f32 %v408, %v409
    %v476 = vadd.f32 %v475, %v410
    %v477 = vadd.f32 %v476, %v411
    %v478 = vrot.slane %v477, 4
    %v479 = vadd.f32 %v477, %v478
    %v480 = vrot.slane %v479, 2
    %v481 = vadd.f32 %v479, %v480
    %v482 = vrot.slane %v481, 1
    %v483 = vadd.f32 %v481, %v482
    %s484 = sld [smem:[#allocation5]]
    %v485 = vstv %s484
    %v486 = vadd.f32 %v420, %v485
    %v487 = vadd.f32 %v429, %v485
    %v488 = vadd.f32 %v438, %v485
    %v489 = vadd.f32 %v447, %v485
    %v490 = vadd.f32 %v456, %v485
    %v491 = vadd.f32 %v465, %v485
    %v492 = vadd.f32 %v474, %v485
    %v493 = vadd.f32 %v483, %v485
    %v494 = vld [vmem:[#allocation12] sm:$0xff]
    %vm495 = vcmp.eq.f32.partialorder %v494, 0.0
    %vm504 = vcmask 1041409
    %v505 = vsel %vm504, %v487, %v486
    %vm506 = vcmask 1042434
    %v507 = vsel %vm506, %v488, %v505
    %vm508 = vcmask 1043459
    %v509 = vsel %vm508, %v489, %v507
    %vm510 = vcmask 1044484
    %v511 = vsel %vm510, %v490, %v509
    %vm512 = vcmask 1045509
    %v513 = vsel %vm512, %v491, %v511
    %vm514 = vcmask 1046534
    %v515 = vsel %vm514, %v492, %v513
    %vm516 = vcmask 1047559
    %v517 = vsel %vm516, %v493, %v515
    %v519 = vsel %vm495, %v517, %v494
    %v520 = vld [vmem:[#allocation2] sm:$0xff]
    %521 = vmax.xlane.f32.xlu0 %v519
    %v522 = vpop.xlane.xlu0 %521
    %v523 = vmax.f32 %v520, %v522
    %v524 = vsub.f32 %v520, %v523
    %v525 = vmul.f32 %v524, 1.442695
    %v526 = vpow.pop %v525
    %528 = vset.pattern.permute.xlu0 0
    %529 = vperm.xlu0 %528, %v523
    %v530 = vpop.permute.xlu0 %529
    %v532 = vsub.f32 %v519, %v530
    %v533 = vmul.f32 %v532, 1.442695
    %v534 = vpow.pop %v533
    %v535 = vld [vmem:[#allocation3] sm:$0xff]
    %v536 = vmul.f32 %v526, %v535
    %537 = vadd.xlane.f32.xlu0 %v534
    %v538 = vpop.xlane.xlu0 %537
    %v539 = vadd.f32 %v536, %v538
    %vm540 = vcmask 7168
    %541 = vst.msk [vmem:[#allocation3] sm:$0xff] %vm540, %v539
    %v542 = vld [vmem:[#allocation4] sm:$0xff]
    %544 = vset.pattern.permute.xlu0 0
    %545 = vperm.xlu0 %544, %v526
    %v546 = vpop.permute.xlu0 %545
    %v548 = vmul.f32 %v546, %v542
    %v549 = vld [vmem:[#allocation11] sm:$0xff]
    %v550 = vld [vmem:[#allocation11 + $0x8] sm:$0xff]
    %v551 = vld [vmem:[#allocation11 + $0x10] sm:$0xff]
    %v552 = vld [vmem:[#allocation11 + $0x18] sm:$0xff]
    %v553 = vld [vmem:[#allocation11 + $0x20] sm:$0xff]
    %v554 = vld [vmem:[#allocation11 + $0x28] sm:$0xff]
    %v555 = vld [vmem:[#allocation11 + $0x30] sm:$0xff]
    %v556 = vld [vmem:[#allocation11 + $0x38] sm:$0xff]
    %v557 = vld [vmem:[#allocation11 + $0x40] sm:$0xff]
    %v558 = vld [vmem:[#allocation11 + $0x48] sm:$0xff]
    %v559 = vld [vmem:[#allocation11 + $0x50] sm:$0xff]
    %v560 = vld [vmem:[#allocation11 + $0x58] sm:$0xff]
    %v561 = vld [vmem:[#allocation11 + $0x60] sm:$0xff]
    %v562 = vld [vmem:[#allocation11 + $0x68] sm:$0xff]
    %v563 = vld [vmem:[#allocation11 + $0x70] sm:$0xff]
    %v564 = vld [vmem:[#allocation11 + $0x78] sm:$0xff]
    %565 = vmatpush.msra.mxu0 %v564
    %566 = vmatpush.msra.mxu0 %v563
    %567 = vmatpush.msra.mxu0 %v562
    %568 = vmatpush.msra.mxu0 %v561
    %569 = vmatpush.msra.mxu0 %v560
    %570 = vmatpush.msra.mxu0 %v559
    %571 = vmatpush.msra.mxu0 %v558
    %572 = vmatpush.msra.mxu0 %v557
    %573 = vmatpush.msra.mxu0 %v556
    %574 = vmatpush.msra.mxu0 %v555
    %575 = vmatpush.msra.mxu0 %v554
    %576 = vmatpush.msra.mxu0 %v553
    %577 = vmatpush.msra.mxu0 %v552
    %578 = vmatpush.msra.mxu0 %v551
    %579 = vmatpush.msra.mxu0 %v550
    %580 = vmatpush.msra.mxu0 %v549
    %581 = vmatmul.f32.gmra.mxu0 %v534
    %v582 = vpop.f32.mrf.mxu0
    %v583 = vadd.f32 0.0, %v582
    %584 = vdwg.mxu0
    %v585 = vadd.f32 %v548, %v583
    %586 = vst [vmem:[#allocation4] sm:$0xff] %v585
    %587 = vst.msk [vmem:[#allocation2] sm:$0xff] %vm540, %v523
    // Predicated region
    $region50: #{tpu_custom_call.1} parent=1 // pred_check
      %p588 = pneg %p99
    $region51: #{tpu_custom_call.1} parent=1 // pred_check_branch
      %590 = sbr.rel (%p588) target = $region53
    $region52: #{tpu_custom_call.1} parent=1 // pred_region
      %v591 = vld [vmem:[#allocation3] sm:$0xff]
      %v592 = vrcp.pop %v591
      %v593 = vmul.f32 %v591, %v592
      %v594 = vsub.f32 2.0, %v593
      %v595 = vmul.f32 %v592, %v594
      %v596 = vld [vmem:[#allocation4] sm:$0xff]
      %598 = vset.pattern.permute.xlu0 0
      %599 = vperm.xlu0 %598, %v595
      %v600 = vpop.permute.xlu0 %599
      %v602 = vmul.f32 %v596, %v600
      %603 = vst [vmem:[#allocation15] sm:$0xff] %v602
    $region53: #{tpu_custom_call.1} parent=1 // pred_fallthru
      _
    // Predicated region
    $region54: #{tpu_custom_call.1} parent=1 // pred_check
      _
    $region55: #{tpu_custom_call.1} parent=1 // pred_check_branch
      %605 = sbr.rel (0) target = $region57
    $region56: #{tpu_custom_call.1} parent=1 // pred_region
      %607 = vsyncadd [#allocation8], 0
      %s609 = sshll.u32 [#allocation15], 4
      %s610 = int_to_ptr.vmem [resolvable:$true] %s609
      %s611 = sshll.u32 %s6, 4
      %s612 = int_to_ptr.hbm [resolvable:$true] %s611
      %614 = dma.vmem_to_hbm [thread:$0]  %s610, 128, %s612, [#allocation8]
    $region57: #{tpu_custom_call.1} parent=1 // pred_fallthru
      _
    // Predicated region
    $region58: #{tpu_custom_call.1} parent=1 // pred_check
      _
    $region59: #{tpu_custom_call.1} parent=1 // pred_check_branch
      %616 = sbr.rel (0) target = $region61
    $region60: #{tpu_custom_call.1} parent=1 // pred_region
      %618 = dma.done [#allocation8], 128
    $region61: #{tpu_custom_call.1} parent=1 // pred_fallthru
      _
    %619 = vsyncpa [#allocation7], 1
    %620 = vsyncpa [#allocation10], 1
    %621 = vsyncpa [#allocation13], 1
    %622 = vsyncpa [#allocation8], 1

</llo_original>
